<compile_context>
chip_gen: v6e
topology: v6e:2x2x1
jax: 0.10.0
libtpu: 0.0.40
codegen_flags: <defaults>
</compile_context>

<pallas_src>
import jax
import jax.numpy as jnp
from jax.experimental import pallas as pl
from jax.experimental.pallas import tpu as pltpu

_MIB = 1024 * 1024


def _cdiv(a: int, b: int) -> int:
    return -(-a // b)


def _round_up(x: int, m: int) -> int:
    return _cdiv(x, m) * m


def _build_pe(embed_l: int, embed_d: int, dtype=jnp.float32) -> jnp.ndarray:
    """Deterministic sinusoidal positional-encoding table (embed_l, embed_d)."""
    pos = jnp.arange(embed_l, dtype=jnp.float32)[:, None]             # (L, 1)
    two_i = jnp.arange(0, embed_d, 2, dtype=jnp.float32)[None, :]     # (1, D//2)
    angle = pos / jnp.power(1000.0, two_i / float(embed_d))           # (L, D//2)
    pe = jnp.zeros((embed_l, embed_d), jnp.float32)
    pe = pe.at[:, 0::2].set(jnp.sin(angle))
    pe = pe.at[:, 1::2].set(jnp.cos(angle))
    return pe.astype(dtype)


def _sublane_rows(itemsize: int) -> int:
    """Rows per VMEM sublane tile for this dtype: (8,128)/(16,128)/(32,128)."""
    return {1: 32, 2: 16, 4: 8}.get(itemsize, 8)


def _physical_vmem_bytes() -> int:
    """Per-core VMEM capacity; conservative 64 MiB (v7x per-TC) fallback."""
    try:
        return int(pltpu.get_tpu_info().vmem_capacity_bytes)
    except Exception:
        return 64 * _MIB


def _choose_packing_factor(batch: int, k: int, sublane: int) -> int:
    """Return f so x:(B,S,D) is processed as (B*f, K/f) and pe as (f, K/f).

    Only used for B == 1 (so the pe block matches the x block exactly and the
    kernel stays a plain add).  Requires f | K and 128 | K/f (lane-dense).
    Prefers f that fills a whole sublane tile; otherwise best partial fill.
    """
    if batch != 1:
        return 1
    best = 1
    for f in range(1, min(k, 8 * sublane) + 1):
        if k % f or (k // f) % 128:
            continue
        if f % sublane == 0:
            return f                       # perfect sublane density
        if f <= sublane and f > best:
            best = f                       # partial improvement
    return best


def _choose_tiles(rows_x: int, rows_pe: int, cols: int, itemsize: int,
                  budget_bytes: int):
    """Pick (row_tile, col_tile, footprint_bytes) with sublane-padded accounting."""
    r = _sublane_rows(itemsize)
    # Row tiling only matters for very large batch (packed B==1 keeps all rows).
    row_tile = rows_x if (rows_pe > 1 or rows_x <= 4096) else 4096
    # Double-buffered x tile + out tile + pe tile, with sublane padding.
    per_col_bytes = 2 * itemsize * (2 * _round_up(row_tile, r)
                                    + _round_up(rows_pe, r))

    if cols <= 128:
        col_tile = cols                    # full (possibly sub-128) extent
    else:
        lane_full = (cols // 128) * 128    # largest 128-multiple <= cols
        max_by_budget = max(128, (budget_bytes // per_col_bytes) // 128 * 128)
        col_tile = min(max_by_budget, lane_full)
        row_steps = _cdiv(rows_x, row_tile)
        # Prefer an even (>=2) number of column steps when the working set is
        # big enough that per-step overhead is negligible: balanced split
        # across v7x's two TensorCores, near-free on single-TC v5e/v6e.
        if (row_steps == 1 and per_col_bytes * col_tile >= 4 * _MIB
                and _cdiv(cols, col_tile) % 2 == 1):
            for s in (2, 4, 6, 8, 12, 16):
                t = min(_round_up(_cdiv(cols, s), 128), lane_full)
                if 128 <= t <= col_tile and _cdiv(cols, t) % 2 == 0:
                    col_tile = t
                    break
    footprint = per_col_bytes * _round_up(col_tile, 128)
    return row_tile, col_tile, footprint


def _pe_add_kernel(x_ref, pe_ref, o_ref):
    # x_ref/o_ref: (row_tile, col_tile); pe_ref: (1, col_tile) broadcast over
    # rows, or (f, col_tile) equal-shape when B==1 is packed.  Plain VPU add.
    o_ref[...] = x_ref[...] + pe_ref[...]


class PositionEncodingPallas:
    """Pallas equivalent of the PyTorch PostionEncoding module."""

    def __init__(self, embed_l: int, embed_d: int, dtype=jnp.float32):
        self.embed_l = embed_l
        self.embed_d = embed_d
        self.pe = _build_pe(embed_l, embed_d, dtype)     # registered buffer
        self._pe_cache = {}                              # (s, f, dtype) -> packed pe

    def _packed_pe(self, s: int, f: int, kp: int, dtype) -> jnp.ndarray:
        key = (s, f, jnp.dtype(dtype).name)
        if key not in self._pe_cache:
            # Hoisted slice + cast + flatten, computed once per shape/dtype.
            self._pe_cache[key] = self.pe[:s].astype(dtype).reshape(f, kp)
        return self._pe_cache[key]

    def __call__(self, x: jnp.ndarray) -> jnp.ndarray:
        b, s, d = x.shape
        assert s <= self.embed_l and d == self.embed_d
        k = s * d
        itemsize = jnp.dtype(x.dtype).itemsize
        sublane = _sublane_rows(itemsize)

        f = _choose_packing_factor(b, k, sublane)
        kp = k // f
        rows = b * f

        x_packed = x.reshape(rows, kp)                   # contiguous, layout-only
        pe_packed = self._packed_pe(s, f, kp, x.dtype)

        phys = _physical_vmem_bytes()
        budget = min(48 * _MIB, phys // 2)
        row_tile, col_tile, footprint = _choose_tiles(rows, f, kp, itemsize, budget)
        vmem_limit = int(min(phys, max(32 * _MIB, footprint + 8 * _MIB)))

        grid = (_cdiv(rows, row_tile), _cdiv(kp, col_tile))

        out_packed = pl.pallas_call(
            _pe_add_kernel,
            out_shape=jax.ShapeDtypeStruct((rows, kp), x.dtype),
            grid=grid,
            in_specs=[
                pl.BlockSpec((row_tile, col_tile), lambda i, j: (i, j)),  # x
                pl.BlockSpec((f, col_tile), lambda i, j: (0, j)),         # pe
            ],
            out_specs=pl.BlockSpec((row_tile, col_tile), lambda i, j: (i, j)),
            compiler_params=pltpu.CompilerParams(
                dimension_semantics=("parallel", "parallel"),
                vmem_limit_bytes=vmem_limit,
            ),
        )(x_packed, pe_packed)

        return out_packed.reshape(b, s, d)


if __name__ == "__main__":
    # Small shapes consistent with the module: embed_l >= seq_len, even embed_d.
    batch, seq_len = 2, 8
    embed_l, embed_d = 16, 32

    key = jax.random.PRNGKey(0)
    module = PositionEncodingPallas(embed_l, embed_d, dtype=jnp.float32)
    pe_ref = module.pe

    # Case 1: batch=2 (lane-dense (B, S*D) path).
    x = jax.random.normal(key, (batch, seq_len, embed_d), dtype=jnp.float32)
    out = jax.block_until_ready(module(x))
    ref = x + pe_ref[:seq_len, :][None, :, :]
    assert out.shape == (batch, seq_len, embed_d)
    assert jnp.allclose(out, ref, atol=1e-6), "mismatch vs reference (B=2)"

    # Case 2: batch=1 (sublane-dense packed path).
    x1 = jax.random.normal(jax.random.PRNGKey(0), (1, seq_len, embed_d),
                           dtype=jnp.float32)
    out1 = jax.block_until_ready(module(x1))
    ref1 = x1 + pe_ref[:seq_len, :][None, :, :]
    assert jnp.allclose(out1, ref1, atol=1e-6), "mismatch vs reference (B=1)"

    print("KERNEL_OK")
</pallas_src>

<mosaic_0001>
module attributes {stable_mosaic.version = 11 : i64} {
  func.func @_pe_add_kernel(%arg0: i32, %arg1: i32, %arg2: memref<2x256xf32, #tpu.memory_space<vmem>>, %arg3: memref<1x256xf32, #tpu.memory_space<vmem>>, %arg4: memref<2x256xf32, #tpu.memory_space<vmem>>) attributes {dimension_semantics = [#tpu.dimension_semantics<parallel>, #tpu.dimension_semantics<parallel>], iteration_bounds = array<i64: 1, 1>, scalar_prefetch = 0 : i64, scratch_operands = 0 : i64, tpu.core_type = #tpu.core_type<tc>, window_params = [{transform_indices = @transform_0, window_bounds = array<i64: 2, 256>}, {transform_indices = @transform_1, window_bounds = array<i64: 1, 256>}, {transform_indices = @transform_2, window_bounds = array<i64: 2, 256>}]} {
    %c0 = arith.constant 0 : index
    %c0_0 = arith.constant 0 : index
    %0 = vector.load %arg2[%c0, %c0_0] : memref<2x256xf32, #tpu.memory_space<vmem>>, vector<2x256xf32>
    %c0_1 = arith.constant 0 : index
    %c0_2 = arith.constant 0 : index
    %1 = vector.load %arg3[%c0_1, %c0_2] : memref<1x256xf32, #tpu.memory_space<vmem>>, vector<1x256xf32>
    %2 = vector.broadcast %1 : vector<1x256xf32> to vector<2x256xf32>
    %3 = arith.addf %0, %2 : vector<2x256xf32>
    %c0_3 = arith.constant 0 : index
    %c0_4 = arith.constant 0 : index
    %4 = vector.load %arg4[%c0_3, %c0_4] : memref<2x256xf32, #tpu.memory_space<vmem>>, vector<2x256xf32>
    tpu.vector_store %arg4[%c0_3, %c0_4], %3 {strides = array<i32>} : memref<2x256xf32, #tpu.memory_space<vmem>>, vector<2x256xf32>,
    return
  }
  func.func @transform_0(%arg0: i32, %arg1: i32) -> (i32, i32) {
    %c0_i32 = arith.constant 0 : i32
    return %arg0, %arg1 : i32, i32
  }
  func.func @transform_1(%arg0: i32, %arg1: i32) -> (i32, i32) {
    %c0_i32 = arith.constant 0 : i32
    %c0_i32_0 = arith.constant 0 : i32
    return %c0_i32, %arg1 : i32, i32
  }
  func.func @transform_2(%arg0: i32, %arg1: i32) -> (i32, i32) {
    %c0_i32 = arith.constant 0 : i32
    return %arg0, %arg1 : i32, i32
  }
}

</mosaic_0001>

<llo_original>
// kernel: tpu_custom_call.1
$region0: #{tpu_custom_call.1}
  #allocation0 [shape = 'u32[]', space=smem, size = 0x4, offset = 0x4, fixed_abs, tag = 'smem constant byte address 0x4 - core index']
  #allocation1 [shape = 'u32[144,128]{1,0:T(1,128)}', space=vmem, size = 0x12000, scoped, tag = 'internal scratch']
  %s0 = inlined_call_operand.hbm [shape: f32[2,256], index: 0, kind: input, shape index: {}]
  %s1 = inlined_call_operand.hbm [shape: f32[1,256], index: 1, kind: input, shape index: {}]
  %s2 = inlined_call_operand.hbm [shape: f32[2,256], index: 2, kind: output, shape index: {}]
  %s3 = sld [smem:[#allocation0]]
  $region26: #{tpu_custom_call.1} parent=0
    _
  %s5 = ssub.s32 1, %s3
  %s6 = scalar_select 0, %s5, %s3
  $region1: #{tpu_custom_call.1} parent=0
    #allocation2 [shape = 'u8[2048]{0}', space=vmem, size = 0x800, scoped, tag = 'input window, operand 0, single buffered']
    #allocation3 [shape = 's32[1]{0}', space=sflag, size = 0x4, scoped, tag = 'scoped memory for tpu_custom_call.1']
    #allocation4 [shape = 's32[1]{0}', space=sflag, size = 0x4, scoped, tag = 'scoped memory for tpu_custom_call.1']
    #allocation5 [shape = 'u8[1024]{0}', space=vmem, size = 0x400, scoped, tag = 'input window, operand 1, single buffered']
    #allocation6 [shape = 's32[1]{0}', space=sflag, size = 0x4, scoped, tag = 'scoped memory for tpu_custom_call.1']
    #allocation7 [shape = 'u8[2048]{0}', space=vmem, size = 0x800, scoped, tag = 'output window, operand 0, single buffered']
    %7 = vsyncpa [#allocation3], 0
    %8 = vsyncpa [#allocation6], 0
    %9 = vsyncpa [#allocation4], 0
    // Predicated region
    $region2: #{tpu_custom_call.1} parent=1 // pred_check
      _
    $region3: #{tpu_custom_call.1} parent=1 // pred_check_branch
      %11 = sbr.rel (0) target = $region5
    $region4: #{tpu_custom_call.1} parent=1 // pred_region
      %s13 = ssub.s32 64, 64
      %14 = vsyncadd [#allocation3], %s13
      %s16 = sshll.u32 [#allocation2], 4
      %s17 = int_to_ptr.vmem [resolvable:$true] %s16
      %19 = dma.hbm_to_vmem [thread:$0]  %s0, 64, %s17, [#allocation3]
    $region5: #{tpu_custom_call.1} parent=1 // pred_fallthru
      _
    // Predicated region
    $region6: #{tpu_custom_call.1} parent=1 // pred_check
      _
    $region7: #{tpu_custom_call.1} parent=1 // pred_check_branch
      %21 = sbr.rel (0) target = $region9
    $region8: #{tpu_custom_call.1} parent=1 // pred_region
      %s23 = ssub.s32 32, 32
      %24 = vsyncadd [#allocation6], %s23
      %s26 = sshll.u32 [#allocation5], 4
      %s27 = int_to_ptr.vmem [resolvable:$true] %s26
      %29 = dma.hbm_to_vmem [thread:$0]  %s1, 32, %s27, [#allocation6]
    $region9: #{tpu_custom_call.1} parent=1 // pred_fallthru
      _
    // Predicated region
    $region10: #{tpu_custom_call.1} parent=1 // pred_check
      _
    $region11: #{tpu_custom_call.1} parent=1 // pred_check_branch
      %31 = sbr.rel (0) target = $region13
    $region12: #{tpu_custom_call.1} parent=1 // pred_region
      %32 = dma.done [#allocation3], 64
    $region13: #{tpu_custom_call.1} parent=1 // pred_fallthru
      _
    // Predicated region
    $region14: #{tpu_custom_call.1} parent=1 // pred_check
      _
    $region15: #{tpu_custom_call.1} parent=1 // pred_check_branch
      %34 = sbr.rel (0) target = $region17
    $region16: #{tpu_custom_call.1} parent=1 // pred_region
      %35 = dma.done [#allocation6], 32
    $region17: #{tpu_custom_call.1} parent=1 // pred_fallthru
      _
    %v36 = vld [vmem:[#allocation2] sm:$0xf]
    %v37 = vld [vmem:[#allocation5] sm:$0x3]
    %v39 = vlaneseq
    %v40 = vshrl.u32 %v39, 7
    %v41 = vsub.s32 0, %v40
    %v42 = vrot.slane %v37, %v41
    %v43 = vlaneseq
    %v44 = vshrl.u32 %v43, 7
    %v45 = vsub.s32 1, %v44
    %v46 = vrot.slane %v37, %v45
    %v47 = vcombine.low %v42, %v46
    %v49 = vunpack.c.l.s4 1983009808
    %v50 = vunpack.c.0.s8 %v49
    %v51 = vlaneseq
    %v52 = vshrl.u32 %v51, 7
    %v53 = vsub.s32 %v50, %v52
    %v54 = vrot.slane %v47, %v53
    %v56 = vadd.f32 %v36, %v54
    %57 = vst [vmem:[#allocation7] sm:$0xf] %v56
    // Predicated region
    $region18: #{tpu_custom_call.1} parent=1 // pred_check
      _
    $region19: #{tpu_custom_call.1} parent=1 // pred_check_branch
      %59 = sbr.rel (0) target = $region21
    $region20: #{tpu_custom_call.1} parent=1 // pred_region
      %s61 = ssub.s32 64, 64
      %62 = vsyncadd [#allocation4], %s61
      %s64 = sshll.u32 [#allocation7], 4
      %s65 = int_to_ptr.vmem [resolvable:$true] %s64
      %67 = dma.vmem_to_hbm [thread:$0]  %s65, 64, %s2, [#allocation4]
    $region21: #{tpu_custom_call.1} parent=1 // pred_fallthru
      _
    // Predicated region
    $region22: #{tpu_custom_call.1} parent=1 // pred_check
      _
    $region23: #{tpu_custom_call.1} parent=1 // pred_check_branch
      %69 = sbr.rel (0) target = $region25
    $region24: #{tpu_custom_call.1} parent=1 // pred_region
      %70 = dma.done [#allocation4], 64
    $region25: #{tpu_custom_call.1} parent=1 // pred_fallthru
      _
    %71 = vsyncpa [#allocation3], 1
    %72 = vsyncpa [#allocation6], 1
    %73 = vsyncpa [#allocation4], 1

</llo_original>
